<compile_context>
chip_gen: v5e
topology: v5e:2x2
jax: 0.10.0
libtpu: 0.0.40
codegen_flags: <defaults>
</compile_context>

<pallas_src>
import functools

import jax
import jax.numpy as jnp
from jax.experimental import pallas as pl
from jax.experimental.pallas import tpu as pltpu

VMEM_LIMIT = 48 * 1024 * 1024   # scoped-VMEM request: > v5e default, <= v7x physical
BN_EPS = 1e-5


def _round_up(x, m):
    return (x + m - 1) // m * m


def _pick_tile(n, prefs, small_cap=1024, fallback=128, granule=16):
    """Tile a dimension: exact divisor from prefs, else full extent (rounded to
    the bf16 sublane granule) when small, else pad to a multiple of fallback."""
    for t in prefs:
        if n % t == 0:
            return t, n
    if n <= small_cap:
        t = _round_up(n, granule)
        return t, t
    return fallback, _round_up(n, fallback)


# --------------------------------------------------------------------------
# Pallas kernels
# --------------------------------------------------------------------------
def _mm_kernel(a_ref, b_ref, o_ref, acc_ref):
    """Tiled matmul, grid=(Mt, Nt, Kt), K innermost.  bf16 in, f32 acc, cast-out."""
    @pl.when(pl.program_id(2) == 0)
    def _():
        acc_ref[...] = jnp.zeros_like(acc_ref)

    acc_ref[...] += jnp.dot(a_ref[...], b_ref[...], preferred_element_type=jnp.float32)

    @pl.when(pl.program_id(2) == pl.num_programs(2) - 1)
    def _():
        o_ref[...] = acc_ref[...].astype(o_ref.dtype)


def _mm_bias_kernel(a_ref, b_ref, bias_ref, o_ref, acc_ref):
    @pl.when(pl.program_id(2) == 0)
    def _():
        acc_ref[...] = jnp.zeros_like(acc_ref)

    acc_ref[...] += jnp.dot(a_ref[...], b_ref[...], preferred_element_type=jnp.float32)

    @pl.when(pl.program_id(2) == pl.num_programs(2) - 1)
    def _():
        o_ref[...] = (acc_ref[...] + bias_ref[...]).astype(o_ref.dtype)


def _mm1_kernel(a_ref, b_ref, o_ref):
    """Single-K-step matmul (no accumulator scratch round-trip)."""
    o_ref[...] = jnp.dot(a_ref[...], b_ref[...],
                         preferred_element_type=jnp.float32).astype(o_ref.dtype)


def _mm1_bias_kernel(a_ref, b_ref, bias_ref, o_ref):
    o_ref[...] = (jnp.dot(a_ref[...], b_ref[...], preferred_element_type=jnp.float32)
                  + bias_ref[...]).astype(o_ref.dtype)


def _grouped_mm_kernel(a_ref, b_ref, o_ref):
    """(G,TM,Kg) x (G,Kg,Ng) -> lane-dense (TM, G*Ng) bf16 (all groups per step)."""
    groups = a_ref.shape[0]
    outs = []
    for g in range(groups):
        outs.append(jnp.dot(a_ref[g], b_ref[g], preferred_element_type=jnp.float32))
    o_ref[...] = jnp.concatenate(outs, axis=-1).astype(o_ref.dtype)


def _bn_stats_kernel(x_ref, sum_ref, ssq_ref):
    """Pass 1: per-channel sum / sum-of-squares, accumulated over row tiles."""
    @pl.when(pl.program_id(1) == 0)
    def _():
        sum_ref[...] = jnp.zeros_like(sum_ref)
        ssq_ref[...] = jnp.zeros_like(ssq_ref)

    x = x_ref[...].astype(jnp.float32)
    sum_ref[...] += jnp.sum(x, axis=0, keepdims=True)
    ssq_ref[...] += jnp.sum(x * x, axis=0, keepdims=True)


def _bn_apply_kernel(x_ref, s_ref, t_ref, o_ref, *, relu):
    """Pass 2: y = x*scale + shift (+ReLU), bf16 out."""
    y = x_ref[...].astype(jnp.float32) * s_ref[...] + t_ref[...]
    if relu:
        y = jnp.maximum(y, 0.0)
    o_ref[...] = y.astype(o_ref.dtype)


def _bn_apply_add_relu_kernel(x_ref, r_ref, s_ref, t_ref, o_ref):
    """Pass 2 (bottleneck tail): ReLU(BN(x) + residual), bf16 out."""
    y = x_ref[...].astype(jnp.float32) * s_ref[...] + t_ref[...]
    y = y + r_ref[...].astype(jnp.float32)
    o_ref[...] = jnp.maximum(y, 0.0).astype(o_ref.dtype)


def _leaky_bn_kernel(x_ref, g_ref, b_ref, o_ref, *, eps, slope):
    """LeakyReLU(0.2) followed by training-mode BatchNorm1d (tiny head tensors)."""
    x = x_ref[...]
    x = jnp.where(x >= 0.0, x, slope * x)
    mean = jnp.mean(x, axis=0, keepdims=True)
    var = jnp.mean(jnp.square(x - mean), axis=0, keepdims=True)
    o_ref[...] = (x - mean) * jax.lax.rsqrt(var + eps) * g_ref[...] + b_ref[...]


def _mean_kernel(x_ref, o_ref):
    o_ref[...] = jnp.mean(x_ref[...].astype(jnp.float32), axis=1)


# --------------------------------------------------------------------------
# GEMM wrappers
# --------------------------------------------------------------------------
def _matmul(a, b, bias=None, out_dtype=jnp.float32):
    """a:(M,K) x b:(K,N) -> (M,N) out_dtype.  bf16 MXU operands, f32 accumulate."""
    M, K = a.shape
    N = b.shape[1]

    TM, Mp = _pick_tile(M, (256, 128))
    if N % 256 == 0:
        TN, Np = 256, N
    elif N % 128 == 0:
        TN, Np = 128, N
    elif N < 256:
        TN, Np = N, N
    else:
        TN, Np = 128, _round_up(N, 128)
    if K <= 512:
        TK = Kp = _round_up(K, 16)
    else:
        for t in (512, 256, 128):
            if K % t == 0:
                TK, Kp = t, K
                break
        else:
            TK, Kp = 128, _round_up(K, 128)

    a = a.astype(jnp.bfloat16)
    b = b.astype(jnp.bfloat16)
    if (Mp, Kp) != (M, K):
        a = jnp.pad(a, ((0, Mp - M), (0, Kp - K)))
    if (Kp, Np) != (K, N):
        b = jnp.pad(b, ((0, Kp - K), (0, Np - N)))

    nk = Kp // TK
    grid = (Mp // TM, Np // TN, nk)
    in_specs = [pl.BlockSpec((TM, TK), lambda i, j, k: (i, k)),
                pl.BlockSpec((TK, TN), lambda i, j, k: (k, j))]
    args = [a, b]
    if bias is not None:
        bias_p = bias.astype(jnp.float32)
        if Np != N:
            bias_p = jnp.pad(bias_p, ((0, Np - N),))
        args.append(bias_p.reshape(1, Np))
        in_specs.append(pl.BlockSpec((1, TN), lambda i, j, k: (0, j)))

    if nk == 1:
        kernel = _mm1_bias_kernel if bias is not None else _mm1_kernel
        scratch = []
    else:
        kernel = _mm_bias_kernel if bias is not None else _mm_kernel
        scratch = [pltpu.VMEM((TM, TN), jnp.float32)]

    out = pl.pallas_call(
        kernel,
        out_shape=jax.ShapeDtypeStruct((Mp, Np), out_dtype),
        grid=grid,
        in_specs=in_specs,
        out_specs=pl.BlockSpec((TM, TN), lambda i, j, k: (i, j)),
        scratch_shapes=scratch,
        compiler_params=pltpu.CompilerParams(
            dimension_semantics=("parallel", "parallel", "arbitrary"),
            vmem_limit_bytes=VMEM_LIMIT),
    )(*args)
    if (Mp, Np) != (M, N):
        out = out[:M, :N]
    return out


def _grouped_matmul(a, b):
    """a:(G,M,Kg) x b:(G,Kg,Ng) -> lane-dense (M, G*Ng) bf16."""
    G, M, Kg = a.shape
    Ng = b.shape[2]
    Cout = G * Ng
    TM, Mp = _pick_tile(M, (256, 128))
    a = a.astype(jnp.bfloat16)
    if Mp != M:
        a = jnp.pad(a, ((0, 0), (0, Mp - M), (0, 0)))

    out = pl.pallas_call(
        _grouped_mm_kernel,
        out_shape=jax.ShapeDtypeStruct((Mp, Cout), jnp.bfloat16),
        grid=(Mp // TM,),
        in_specs=[pl.BlockSpec((G, TM, Kg), lambda i: (0, i, 0)),
                  pl.BlockSpec((G, Kg, Ng), lambda i: (0, 0, 0))],
        out_specs=pl.BlockSpec((TM, Cout), lambda i: (i, 0)),
        compiler_params=pltpu.CompilerParams(
            dimension_semantics=("parallel",), vmem_limit_bytes=VMEM_LIMIT),
    )(a, b.astype(jnp.bfloat16))
    return out[:M] if Mp != M else out


# --------------------------------------------------------------------------
# Convolution wrappers (weights stored pre-transposed / pre-cast bf16)
# --------------------------------------------------------------------------
@functools.partial(jax.jit, static_argnames=("stride",))
def conv1x1(x, w_mat, *, stride=1):
    """1x1 conv, bias=False.  w_mat: (Cin, Cout) bf16."""
    if stride > 1:
        x = x[:, ::stride, ::stride, :]
    B, Ho, Wo, Cin = x.shape
    out = _matmul(x.reshape(B * Ho * Wo, Cin), w_mat, out_dtype=jnp.bfloat16)
    return out.reshape(B, Ho, Wo, w_mat.shape[1])


@jax.jit
def conv_stem_7x7(x, w_mat):
    """7x7 stride-2 pad-3 stem conv.  w_mat: (7*7*3 padded to 160, 64) handled in _matmul."""
    B, H, W, Cin = x.shape
    k, s, p = 7, 2, 3
    Ho = (H + 2 * p - k) // s + 1
    Wo = (W + 2 * p - k) // s + 1
    xp = jnp.pad(x, ((0, 0), (p, p), (p, p), (0, 0)))
    cols = [xp[:, i:i + s * Ho:s, j:j + s * Wo:s, :] for i in range(k) for j in range(k)]
    patches = jnp.stack(cols, axis=3).reshape(B * Ho * Wo, k * k * Cin)
    out = _matmul(patches, w_mat, out_dtype=jnp.bfloat16)
    return out.reshape(B, Ho, Wo, w_mat.shape[1])


@functools.partial(jax.jit, static_argnames=("stride",))
def conv_grouped3x3(x, w_g, *, stride):
    """3x3 grouped (G=32) conv, pad=1.  w_g: (G, Kg_padded, Cout_g) bf16."""
    B, H, W, Cin = x.shape
    G, kg_p, ng = w_g.shape
    cin_g = Cin // G
    kg = 9 * cin_g
    Ho = (H + 2 - 3) // stride + 1
    Wo = (W + 2 - 3) // stride + 1
    xp = jnp.pad(x, ((0, 0), (1, 1), (1, 1), (0, 0)))
    cols = [xp[:, i:i + stride * Ho:stride, j:j + stride * Wo:stride, :]
            for i in range(3) for j in range(3)]
    M = B * Ho * Wo
    patches = jnp.stack(cols, axis=3)                          # (B,Ho,Wo,9,Cin) bf16
    # TODO(synk): fold this im2col + group relayout into the GEMM via in-kernel
    #             strided shifted-window reads of the padded NHWC map.
    a = patches.reshape(M, 9, G, cin_g).transpose(2, 0, 1, 3).reshape(G, M, kg)
    if kg_p != kg:
        a = jnp.pad(a, ((0, 0), (0, 0), (0, kg_p - kg)))
    out = _grouped_matmul(a, w_g)                              # (M, G*ng) bf16 lane-dense
    return out.reshape(B, Ho, Wo, G * ng)


@jax.jit
def linear(x, w_t, b):
    """torch nn.Linear; w_t pre-transposed (in, out) bf16, bias f32."""
    return _matmul(x, w_t, bias=b, out_dtype=jnp.float32)


# --------------------------------------------------------------------------
# BatchNorm (two-pass, row-tiled), pooling, head activation
# --------------------------------------------------------------------------
def _bn_stats(x2d):
    Mr, C = x2d.shape
    CT = 128 if C % 128 == 0 else C
    TR, Mp = _pick_tile(Mr, (512, 256, 128))
    if Mp != Mr:
        x2d = jnp.pad(x2d, ((0, Mp - Mr), (0, 0)))   # zero rows: sums unaffected
    grid = (C // CT, Mp // TR)
    return pl.pallas_call(
        _bn_stats_kernel,
        out_shape=(jax.ShapeDtypeStruct((1, C), jnp.float32),
                   jax.ShapeDtypeStruct((1, C), jnp.float32)),
        grid=grid,
        in_specs=[pl.BlockSpec((TR, CT), lambda j, r: (r, j))],
        out_specs=(pl.BlockSpec((1, CT), lambda j, r: (0, j)),
                   pl.BlockSpec((1, CT), lambda j, r: (0, j))),
        compiler_params=pltpu.CompilerParams(
            dimension_semantics=("parallel", "arbitrary"),
            vmem_limit_bytes=VMEM_LIMIT),
    )(x2d)


def _bn_scale_shift(x2d, gamma, beta):
    Mr, C = x2d.shape
    s, q = _bn_stats(x2d)
    mean = s / Mr
    var = jnp.maximum(q / Mr - mean * mean, 0.0)
    scale = gamma.reshape(1, C).astype(jnp.float32) * jax.lax.rsqrt(var + BN_EPS)
    shift = beta.reshape(1, C).astype(jnp.float32) - mean * scale
    return scale, shift


def _bn_apply(x2d, scale, shift, *, relu, res2d=None):
    Mr, C = x2d.shape
    CT = 128 if C % 128 == 0 else C
    TR, Mp = _pick_tile(Mr, (512, 256, 128))
    pad = Mp != Mr
    if pad:
        x2d = jnp.pad(x2d, ((0, Mp - Mr), (0, 0)))
        if res2d is not None:
            res2d = jnp.pad(res2d, ((0, Mp - Mr), (0, 0)))
    grid = (Mp // TR, C // CT)
    row_spec = pl.BlockSpec((TR, CT), lambda i, j: (i, j))
    vec_spec = pl.BlockSpec((1, CT), lambda i, j: (0, j))
    if res2d is None:
        kernel = functools.partial(_bn_apply_kernel, relu=relu)
        in_specs = [row_spec, vec_spec, vec_spec]
        args = (x2d, scale, shift)
    else:
        kernel = _bn_apply_add_relu_kernel
        in_specs = [row_spec, row_spec, vec_spec, vec_spec]
        args = (x2d, res2d, scale, shift)
    y = pl.pallas_call(
        kernel,
        out_shape=jax.ShapeDtypeStruct((Mp, C), jnp.bfloat16),
        grid=grid,
        in_specs=in_specs,
        out_specs=row_spec,
        compiler_params=pltpu.CompilerParams(
            dimension_semantics=("parallel", "parallel"),
            vmem_limit_bytes=VMEM_LIMIT),
    )(*args)
    return y[:Mr] if pad else y


@functools.partial(jax.jit, static_argnames=("relu",))
def bn2d(x, gamma, beta, *, relu):
    B, H, W, C = x.shape
    x2 = x.reshape(B * H * W, C)
    scale, shift = _bn_scale_shift(x2, gamma, beta)
    return _bn_apply(x2, scale, shift, relu=relu).reshape(B, H, W, C)


@jax.jit
def bn2d_add_relu(x, res, gamma, beta):
    B, H, W, C = x.shape
    x2 = x.reshape(B * H * W, C)
    r2 = res.reshape(B * H * W, C)
    scale, shift = _bn_scale_shift(x2, gamma, beta)
    return _bn_apply(x2, scale, shift, relu=True, res2d=r2).reshape(B, H, W, C)


@jax.jit
def leaky_bn1d(x, gamma, beta):
    Mb, C = x.shape
    CT = 128 if C % 128 == 0 else C
    return pl.pallas_call(
        functools.partial(_leaky_bn_kernel, eps=BN_EPS, slope=0.2),
        out_shape=jax.ShapeDtypeStruct((Mb, C), jnp.float32),
        grid=(C // CT,),
        in_specs=[pl.BlockSpec((Mb, CT), lambda j: (0, j)),
                  pl.BlockSpec((1, CT), lambda j: (0, j)),
                  pl.BlockSpec((1, CT), lambda j: (0, j))],
        out_specs=pl.BlockSpec((Mb, CT), lambda j: (0, j)),
        compiler_params=pltpu.CompilerParams(
            dimension_semantics=("parallel",), vmem_limit_bytes=VMEM_LIMIT),
    )(x.astype(jnp.float32), gamma.reshape(1, C).astype(jnp.float32),
      beta.reshape(1, C).astype(jnp.float32))


@jax.jit
def maxpool_3x3_s2_p1(x):
    """Unrolled 9-tap elementwise max over shifted strided views (XLA-fused);
    avoids materializing a 9x patch tensor.  bf16 throughout."""
    B, H, W, C = x.shape
    xp = jnp.pad(x, ((0, 0), (1, 1), (1, 1), (0, 0)), constant_values=-jnp.inf)
    Ho = (H + 2 - 3) // 2 + 1
    Wo = (W + 2 - 3) // 2 + 1
    out = None
    for i in range(3):
        for j in range(3):
            s = xp[:, i:i + 2 * Ho:2, j:j + 2 * Wo:2, :]
            out = s if out is None else jnp.maximum(out, s)
    return out


@jax.jit
def global_avgpool(x):
    """AdaptiveAvgPool2d((1,1)) + Flatten -> (B, C) f32."""
    B, H, W, C = x.shape
    HW = H * W
    CT = 128 if C % 128 == 0 else C
    return pl.pallas_call(
        _mean_kernel,
        out_shape=jax.ShapeDtypeStruct((B, C), jnp.float32),
        grid=(C // CT,),
        in_specs=[pl.BlockSpec((B, HW, CT), lambda j: (0, 0, j))],
        out_specs=pl.BlockSpec((B, CT), lambda j: (0, j)),
        compiler_params=pltpu.CompilerParams(
            dimension_semantics=("parallel",), vmem_limit_bytes=VMEM_LIMIT),
    )(x.reshape(B, HW, C))


# --------------------------------------------------------------------------
# Parameters (deterministic synthetic init; torchvision resnext50_32x4d shapes,
# stored pre-transposed in GEMM layout, bf16)
# --------------------------------------------------------------------------
def _bn_params(c):
    return (jnp.ones(c, jnp.float32), jnp.zeros(c, jnp.float32))


def _conv_mat(key, k_in, c_out):
    w = jax.random.normal(key, (k_in, c_out), jnp.float32) * (2.0 / k_in) ** 0.5
    return w.astype(jnp.bfloat16)


def _grouped_mat(key, g, kg, ng):
    w = jax.random.normal(key, (g, kg, ng), jnp.float32) * (2.0 / kg) ** 0.5
    kg_p = _round_up(kg, 16)
    if kg_p != kg:
        w = jnp.pad(w, ((0, 0), (0, kg_p - kg), (0, 0)))
    return w.astype(jnp.bfloat16)


def _linear_params(key, c_in, c_out):
    k1, k2 = jax.random.split(key)
    bound = 1.0 / (c_in ** 0.5)
    w_t = jax.random.uniform(k1, (c_in, c_out), jnp.float32, -bound, bound)
    b = jax.random.uniform(k2, (c_out,), jnp.float32, -bound, bound)
    return w_t.astype(jnp.bfloat16), b


def make_params(key, num_classes):
    keys = iter(jax.random.split(key, 96))
    p = {"stem_w": _conv_mat(next(keys), 7 * 7 * 3, 64), "bn1": _bn_params(64)}

    groups, base_width, expansion = 32, 4, 4                  # resnext50_32x4d
    cfg = [(64, 3), (128, 4), (256, 6), (512, 3)]
    inplanes = 64
    layers = []
    for li, (planes, nblocks) in enumerate(cfg):
        width = planes * base_width // 64 * groups
        out_ch = planes * expansion
        stride = 1 if li == 0 else 2
        blocks = []
        for bi in range(nblocks):
            cin_g = width // groups
            blk = {
                "w1": _conv_mat(next(keys), inplanes, width),
                "bn1": _bn_params(width),
                "w2": _grouped_mat(next(keys), groups, 9 * cin_g, cin_g),
                "bn2": _bn_params(width),
                "w3": _conv_mat(next(keys), width, out_ch),
                "bn3": _bn_params(out_ch),
            }
            if bi == 0 and (stride != 1 or inplanes != out_ch):
                blk["wd"] = _conv_mat(next(keys), inplanes, out_ch)
                blk["bnd"] = _bn_params(out_ch)
            blocks.append(blk)
            inplanes = out_ch
        layers.append(blocks)
    p["layers"] = layers

    dims = [(2048, 1024), (1024, 512), (512, 128), (128, num_classes)]
    p["cls"] = [_linear_params(next(keys), cin, cout) for cin, cout in dims]
    p["cls_bn"] = [_bn_params(c) for c in (1024, 512, 128)]
    return p


# --------------------------------------------------------------------------
# Forward pass
# --------------------------------------------------------------------------
def _bottleneck(x, blk, stride):
    identity = x
    out = conv1x1(x, blk["w1"], stride=1)
    out = bn2d(out, *blk["bn1"], relu=True)
    out = conv_grouped3x3(out, blk["w2"], stride=stride)
    out = bn2d(out, *blk["bn2"], relu=True)
    out = conv1x1(out, blk["w3"], stride=1)
    if "wd" in blk:
        identity = conv1x1(x, blk["wd"], stride=stride)
        identity = bn2d(identity, *blk["bnd"], relu=False)
    return bn2d_add_relu(out, identity, *blk["bn3"])


def resnext50_forward(params, x_nchw):
    # boundary: NCHW f32 (PyTorch) -> NHWC bf16 (kernel layout)
    x = jnp.transpose(x_nchw, (0, 2, 3, 1)).astype(jnp.bfloat16)
    x = conv_stem_7x7(x, params["stem_w"])
    x = bn2d(x, *params["bn1"], relu=True)
    x = maxpool_3x3_s2_p1(x)
    for li, blocks in enumerate(params["layers"]):
        for bi, blk in enumerate(blocks):
            stride = (1 if li == 0 else 2) if bi == 0 else 1
            x = _bottleneck(x, blk, stride)
    x = global_avgpool(x)                                     # (B, 2048) == Flatten output

    (w1, b1), (w2, b2), (w3, b3), (w4, b4) = params["cls"]
    (g1, be1), (g2, be2), (g3, be3) = params["cls_bn"]
    h = leaky_bn1d(linear(x, w1, b1), g1, be1)
    h = leaky_bn1d(linear(h, w2, b2), g2, be2)
    h = leaky_bn1d(linear(h, w3, b3), g3, be3)
    return linear(h, w4, b4)


# --------------------------------------------------------------------------
if __name__ == "__main__":
    num_classes = 10
    key = jax.random.PRNGKey(0)
    pkey, xkey = jax.random.split(key)

    params = make_params(pkey, num_classes)

    # small-but-valid input: batch=2, 3 channels, 32x32 spatial (NCHW, like PyTorch)
    x = jax.random.normal(xkey, (2, 3, 32, 32), jnp.float32)

    out = resnext50_forward(params, x)
    out = jax.block_until_ready(out)

    assert out.shape == (2, num_classes), out.shape
    assert bool(jnp.all(jnp.isfinite(out)))
    print("KERNEL_OK")
</pallas_src>

<mosaic_0001>
module attributes {stable_mosaic.version = 11 : i64} {
  func.func @_mm1_kernel(%arg0: i32, %arg1: i32, %arg2: i32, %arg3: memref<256x160xbf16, #tpu.memory_space<vmem>>, %arg4: memref<160x64xbf16, #tpu.memory_space<vmem>>, %arg5: memref<256x64xbf16, #tpu.memory_space<vmem>>) attributes {dimension_semantics = [#tpu.dimension_semantics<parallel>, #tpu.dimension_semantics<parallel>, #tpu.dimension_semantics<arbitrary>], iteration_bounds = array<i64: 2, 1, 1>, scalar_prefetch = 0 : i64, scratch_operands = 0 : i64, tpu.core_type = #tpu.core_type<tc>, window_params = [{transform_indices = @transform_0, window_bounds = array<i64: 256, 160>}, {transform_indices = @transform_1, window_bounds = array<i64: 160, 64>}, {transform_indices = @transform_2, window_bounds = array<i64: 256, 64>}]} {
    %c0 = arith.constant 0 : index
    %c0_0 = arith.constant 0 : index
    %0 = vector.load %arg3[%c0, %c0_0] : memref<256x160xbf16, #tpu.memory_space<vmem>>, vector<256x160xbf16>
    %c0_1 = arith.constant 0 : index
    %c0_2 = arith.constant 0 : index
    %1 = vector.load %arg4[%c0_1, %c0_2] : memref<160x64xbf16, #tpu.memory_space<vmem>>, vector<160x64xbf16>
    %cst = arith.constant dense<0.000000e+00> : vector<256x64xf32>
    %2 = tpu.matmul %0, %1, %cst {dimension_numbers = #tpu.dot_dimension_numbers<[1], [0], [0], [1], [0, 0, 1, 1], [], []>} : vector<256x160xbf16>, vector<160x64xbf16>, vector<256x64xf32> -> vector<256x64xf32>
    %3 = arith.truncf %2 : vector<256x64xf32> to vector<256x64xbf16>
    %c0_3 = arith.constant 0 : index
    %c0_4 = arith.constant 0 : index
    %4 = vector.load %arg5[%c0_3, %c0_4] : memref<256x64xbf16, #tpu.memory_space<vmem>>, vector<256x64xbf16>
    tpu.vector_store %arg5[%c0_3, %c0_4], %3 {strides = array<i32>} : memref<256x64xbf16, #tpu.memory_space<vmem>>, vector<256x64xbf16>,
    return
  }
  func.func @transform_0(%arg0: i32, %arg1: i32, %arg2: i32) -> (i32, i32) {
    %c0_i32 = arith.constant 0 : i32
    return %arg0, %arg2 : i32, i32
  }
  func.func @transform_1(%arg0: i32, %arg1: i32, %arg2: i32) -> (i32, i32) {
    %c0_i32 = arith.constant 0 : i32
    return %arg2, %arg1 : i32, i32
  }
  func.func @transform_2(%arg0: i32, %arg1: i32, %arg2: i32) -> (i32, i32) {
    %c0_i32 = arith.constant 0 : i32
    return %arg0, %arg1 : i32, i32
  }
}

</mosaic_0001>

<llo_original>
// kernel: conv_stem_7x7.1
$region0: #{conv_stem_7x7.1}
  #allocation0 [shape = 'u32[]', space=smem, size = 0x4, offset = 0x4, fixed_abs, tag = 'smem constant byte address 0x4 - core index']
  #allocation1 [shape = 'u32[72,128]{1,0:T(1,128)}', space=vmem, size = 0x9000, scoped, tag = 'internal scratch']
  %s0 = inlined_call_operand.vmem [shape: bf16[512,160], index: 0, kind: input, shape index: {}]
  %s1 = inlined_call_operand.vmem [shape: bf16[160,64], index: 1, kind: input, shape index: {}]
  %s2 = inlined_call_operand.hbm [shape: bf16[512,64], index: 2, kind: output, shape index: {}]
  %s3 = sld [smem:[#allocation0]]
  $region41: #{conv_stem_7x7.1} parent=0
    _
  %s5 = ssub.s32 1, %s3
  %s6 = scalar_select 0, %s5, %s3
  $region1: #{conv_stem_7x7.1} parent=0
    #allocation2 [shape = 'u8[131072]{0}', space=vmem, size = 0x20000, scoped, tag = 'output window, operand 0']
    #allocation3 [shape = 's32[2]{0}', space=sflag, size = 0x8, scoped, tag = 'scoped memory for conv_stem_7x7.1']
    %7 = vsyncpa [#allocation3], 0
    %s8 = scalar_lea.sflag [#allocation3], 1
    %9 = vsyncpa %s8, 0
    loop: start=0, step=1, limit=4
    $region2: #{conv_stem_7x7.1} parent=1 // loop_pre_header
      _
    $region3: #{conv_stem_7x7.1} parent=1 // loop_header
      %s11 = sphi 0, %s15
      %p12 = scmp.ge.s32.totalorder %s11, 4
      %s18 = sphi 0, %s37
      %s19 = sphi 0, %s33
      %s20 = sphi 0, %s29
      %s21 = sphi 0, %s18
      %s22 = sphi 0, %s19
      %s23 = sphi 0, %s20
      %s24 = sphi 0, %s21
      %s25 = sphi 0, %s22
      %s26 = sphi 0, %s23
      %s42 = sphi 0, %s44
      %s45 = sphi 0, %s42
      %s46 = sphi 0, %s45
      %s62 = sphi 0, %s46
      %s70 = sphi 0, %s72
      %s73 = sphi 0, %s70
      %s74 = sphi 0, %s73
      %s90 = sphi 0, %s74
      %s98 = sphi 0, %s100
      %s101 = sphi 0, %s98
      %s102 = sphi 0, %s101
      %s118 = sphi 0, %s102
    $region4: #{conv_stem_7x7.1} parent=1 // loop_header_branch
      %14 = sbr.rel (%p12) target = $region8
    $region5: #{conv_stem_7x7.1} parent=1 // loop_body
      %s16 = ssub.s32 %s11, 1
      %s17 = ssub.s32 %s11, 2
      %s27 = sadd.s32 1, %s20
      %p28 = scmp.ge.s32.totalorder %s27, 1
      %s29 = scalar_select %p28, 0, %s27
      %s30 = sadd.s32 1, %s19
      %s31 = scalar_select %p28, %s30, %s19
      %p32 = scmp.ge.s32.totalorder %s31, 1
      %s33 = scalar_select %p32, 0, %s31
      %s34 = sadd.s32 1, %s18
      %s35 = scalar_select %p32, %s34, %s18
      %p36 = scmp.ge.s32.totalorder %s35, 2
      %s37 = scalar_select %p36, 0, %s35
      %s38 = ssub.s32 %s18, %s37
      %s39 = ssub.s32 %s20, %s29
      %s40 = sor.u32 %s38, %s39
      %p41 = scmp.eq.s32.totalorder %s40, 0
      %s43 = sadd.s32 %s42, 1
      %s44 = scalar_select %p41, %s42, %s43
      %p47 = pneg %p41
      %p48 = scmp.eq.s32.totalorder %s11, 1
      %p49 = por %p47, %p48
      %p50 = scmp.ne.s32.totalorder %s42, %s45
      %p51 = scmp.eq.s32.totalorder %s11, 0
      %p52 = por %p50, %p51
      %p53 = scmp.ne.s32.totalorder %s42, %s45
      %p54 = scmp.eq.s32.totalorder %s16, 1
      %p55 = por %p53, %p54
      %p56 = scmp.ne.s32.totalorder %s45, %s46
      %p57 = scmp.eq.s32.totalorder %s16, 0
      %p58 = por %p56, %p57
      %p59 = scmp.ne.s32.totalorder %s45, %s46
      %p60 = scmp.eq.s32.totalorder %s17, 1
      %p61 = por %p59, %p60
      %p63 = scmp.ne.s32.totalorder %s46, %s62
      %p64 = scmp.eq.s32.totalorder %s17, 0
      %p65 = por %p63, %p64
      %s66 = ssub.s32 %s20, %s29
      %s67 = ssub.s32 %s19, %s33
      %s68 = sor.u32 %s66, %s67
      %p69 = scmp.eq.s32.totalorder %s68, 0
      %s71 = sadd.s32 %s70, 1
      %s72 = scalar_select %p69, %s70, %s71
      %p75 = pneg %p69
      %p76 = scmp.eq.s32.totalorder %s11, 1
      %p77 = por %p75, %p76
      %p78 = scmp.ne.s32.totalorder %s70, %s73
      %p79 = scmp.eq.s32.totalorder %s11, 0
      %p80 = por %p78, %p79
      %p81 = scmp.ne.s32.totalorder %s70, %s73
      %p82 = scmp.eq.s32.totalorder %s16, 1
      %p83 = por %p81, %p82
      %p84 = scmp.ne.s32.totalorder %s73, %s74
      %p85 = scmp.eq.s32.totalorder %s16, 0
      %p86 = por %p84, %p85
      %p87 = scmp.ne.s32.totalorder %s73, %s74
      %p88 = scmp.eq.s32.totalorder %s17, 1
      %p89 = por %p87, %p88
      %p91 = scmp.ne.s32.totalorder %s74, %s90
      %p92 = scmp.eq.s32.totalorder %s17, 0
      %p93 = por %p91, %p92
      %s94 = ssub.s32 %s18, %s37
      %s95 = ssub.s32 %s19, %s33
      %s96 = sor.u32 %s94, %s95
      %p97 = scmp.eq.s32.totalorder %s96, 0
      %s99 = sadd.s32 %s98, 1
      %s100 = scalar_select %p97, %s98, %s99
      %p103 = pneg %p97
      %p104 = scmp.eq.s32.totalorder %s11, 1
      %p105 = por %p103, %p104
      %p106 = scmp.ne.s32.totalorder %s98, %s101
      %p107 = scmp.eq.s32.totalorder %s11, 0
      %p108 = por %p106, %p107
      %p109 = scmp.ne.s32.totalorder %s98, %s101
      %p110 = scmp.eq.s32.totalorder %s16, 1
      %p111 = por %p109, %p110
      %p112 = scmp.ne.s32.totalorder %s101, %s102
      %p113 = scmp.eq.s32.totalorder %s16, 0
      %p114 = por %p112, %p113
      %p115 = scmp.ne.s32.totalorder %s101, %s102
      %p116 = scmp.eq.s32.totalorder %s17, 1
      %p117 = por %p115, %p116
      %p119 = scmp.ne.s32.totalorder %s102, %s118
      %p120 = scmp.eq.s32.totalorder %s17, 0
      %p121 = por %p119, %p120
      %p122 = scmp.le.s32.totalorder 1, %s11
      %p123 = scmp.lt.s32.totalorder %s11, 3
      %p124 = pnand %p122, %p123
      %p125 = pneg %p124
      // Predicated region
      $region9: #{conv_stem_7x7.1} parent=5 // pred_check
        _
      $region10: #{conv_stem_7x7.1} parent=5 // pred_check_branch
        %127 = sbr.rel (%p124) target = $region12
      $region11: #{conv_stem_7x7.1} parent=5 // pred_region
        %s128 = ssub.s32 %s11, 1
        // Predicated region
        $region13: #{conv_stem_7x7.1} parent=11 // pred_check
          %p129 = pneg %p86
        $region14: #{conv_stem_7x7.1} parent=11 // pred_check_branch
          %131 = sbr.rel (%p129) target = $region16
        $region15: #{conv_stem_7x7.1} parent=11 // pred_region
          %s132 = smul.u32 20, %s23
          %p133 = scmp.lt.s32.totalorder %s132, 19
          %s134 = scalar_select %p133, %s132, 19
          %p135 = scmp.lt.s32.totalorder %s22, 0
          %s136 = scalar_select %p135, %s22, 0
          %s137 = sadd.s32 %s136, %s134
          %s138 = smul.addr %s137, 4
          %s139 = scalar_lea.vmem %s1, %s138
          %s140 = smul.u32 20, %s23
        $region16: #{conv_stem_7x7.1} parent=11 // pred_fallthru
          _
      $region12: #{conv_stem_7x7.1} parent=5 // pred_fallthru
        _
      %p141 = scmp.lt.s32.totalorder %s11, 2
      // Predicated region
      $region17: #{conv_stem_7x7.1} parent=5 // pred_check
        %p142 = pneg %p141
      $region18: #{conv_stem_7x7.1} parent=5 // pred_check_branch
        %144 = sbr.rel (%p142) target = $region20
      $region19: #{conv_stem_7x7.1} parent=5 // pred_region
        // Predicated region
        $region21: #{conv_stem_7x7.1} parent=19 // pred_check
          %p145 = pneg %p52
        $region22: #{conv_stem_7x7.1} parent=19 // pred_check_branch
          %147 = sbr.rel (%p145) target = $region24
        $region23: #{conv_stem_7x7.1} parent=19 // pred_region
          %s148 = smul.u32 32, %s18
          %s149 = smul.u32 2, %s20
          %p150 = scmp.lt.s32.totalorder %s148, 63
          %s151 = scalar_select %p150, %s148, 63
          %p152 = scmp.lt.s32.totalorder %s149, 1
          %s153 = scalar_select %p152, %s149, 1
          %s154 = smul.addr %s151, 2
          %s155 = sadd.s32 %s153, %s154
          %s156 = smul.addr %s155, 4
          %s157 = scalar_lea.vmem %s0, %s156
          %s158 = smul.u32 32, %s18
          %s159 = smul.u32 2, %s20
        $region24: #{conv_stem_7x7.1} parent=19 // pred_fallthru
          _
      $region20: #{conv_stem_7x7.1} parent=5 // pred_fallthru
        _
      %p160 = scmp.le.s32.totalorder 1, %s11
      %p161 = scmp.lt.s32.totalorder %s11, 3
      %p162 = pnand %p160, %p161
      %p163 = pneg %p162
      // Predicated region
      $region25: #{conv_stem_7x7.1} parent=5 // pred_check
        _
      $region26: #{conv_stem_7x7.1} parent=5 // pred_check_branch
        %165 = sbr.rel (%p162) target = $region28
      $region27: #{conv_stem_7x7.1} parent=5 // pred_region
        %s166 = ssub.s32 %s11, 1
        %s167 = smul.u32 32, %s21
        %s168 = smul.u32 2, %s23
        %p169 = scmp.lt.s32.totalorder %s167, 63
        %s170 = scalar_select %p169, %s167, 63
        %p171 = scmp.lt.s32.totalorder %s168, 1
        %s172 = scalar_select %p171, %s168, 1
        %s173 = smul.addr %s170, 2
        %s174 = sadd.s32 %s172, %s173
        %s175 = smul.addr %s174, 4
        %s176 = scalar_lea.vmem %s0, %s175
        %p177 = pneg %p58
        %p178 = pneg %p55
        %s179 = smul.u32 20, %s23
        %p180 = scmp.lt.s32.totalorder %s179, 19
        %s181 = scalar_select %p180, %s179, 19
        %p182 = scmp.lt.s32.totalorder %s22, 0
        %s183 = scalar_select %p182, %s22, 0
        %s184 = sadd.s32 %s183, %s181
        %s185 = smul.addr %s184, 4
        %s186 = scalar_lea.vmem %s1, %s185
        %p187 = pneg %p86
        %p188 = pneg %p83
        %p189 = pneg %p114
        %p190 = pneg %p111
        %s191 = sand.u32 %s101, 1
        %s192 = scalar_lea.sflag [#allocation3], %s191
        %s193 = sand.u32 %s101, 1
        %s194 = smul.addr %s193, 128
        %s195 = scalar_lea.vmem [#allocation2], %s194
        %s196 = smul.u32 32, %s21
        %s197 = smul.u32 2, %s23
        %p198 = scmp.lt.s32.totalorder %s196, 63
        %s199 = scalar_select %p198, %s196, 63
        %p200 = scmp.lt.s32.totalorder %s197, 1
        %s201 = scalar_select %p200, %s197, 1
        %s202 = smul.addr %s199, 2
        %s203 = sadd.s32 %s201, %s202
        %s204 = smul.addr %s203, 4
        %s205 = scalar_lea.vmem %s0, %s204
        %s206 = smul.u32 32, %s21
        %s207 = smul.u32 2, %s23
        %s208 = smul.u32 20, %s23
        %p209 = scmp.lt.s32.totalorder %s208, 19
        %s210 = scalar_select %p209, %s208, 19
        %p211 = scmp.lt.s32.totalorder %s22, 0
        %s212 = scalar_select %p211, %s22, 0
        %s213 = sadd.s32 %s212, %s210
        %s214 = smul.addr %s213, 4
        %s215 = scalar_lea.vmem %s1, %s214
        %s216 = smul.u32 20, %s23
        %s217 = smul.u32 32, %s21
        %v219 = vld [vmem:[%s205] sm:$0xff]
        %v220 = vld [vmem:[%s205 + $0x8] sm:$0xff]
        %v221 = vld [vmem:[%s205 + $0x10] sm:$0xff]
        %v222 = vld [vmem:[%s205 + $0x18] sm:$0xff]
        %v223 = vld [vmem:[%s205 + $0x20] sm:$0xff]
        %v224 = vld [vmem:[%s205 + $0x28] sm:$0xff]
        %v225 = vld [vmem:[%s205 + $0x30] sm:$0xff]
        %v226 = vld [vmem:[%s205 + $0x38] sm:$0xff]
        %v227 = vld [vmem:[%s205 + $0x40] sm:$0xff]
        %v228 = vld [vmem:[%s205 + $0x48] sm:$0xff]
        %v229 = vld [vmem:[%s205 + $0x50] sm:$0xff]
        %v230 = vld [vmem:[%s205 + $0x58] sm:$0xff]
        %v231 = vld [vmem:[%s205 + $0x60] sm:$0xff]
        %v232 = vld [vmem:[%s205 + $0x68] sm:$0xff]
        %v233 = vld [vmem:[%s205 + $0x70] sm:$0xff]
        %v234 = vld [vmem:[%s205 + $0x78] sm:$0xff]
        %v235 = vld [vmem:[%s205 + $0x80] sm:$0xff]
        %v236 = vld [vmem:[%s205 + $0x88] sm:$0xff]
        %v237 = vld [vmem:[%s205 + $0x90] sm:$0xff]
        %v238 = vld [vmem:[%s205 + $0x98] sm:$0xff]
        %v239 = vld [vmem:[%s205 + $0xa0] sm:$0xff]
        %v240 = vld [vmem:[%s205 + $0xa8] sm:$0xff]
        %v241 = vld [vmem:[%s205 + $0xb0] sm:$0xff]
        %v242 = vld [vmem:[%s205 + $0xb8] sm:$0xff]
        %v243 = vld [vmem:[%s205 + $0xc0] sm:$0xff]
        %v244 = vld [vmem:[%s205 + $0xc8] sm:$0xff]
        %v245 = vld [vmem:[%s205 + $0xd0] sm:$0xff]
        %v246 = vld [vmem:[%s205 + $0xd8] sm:$0xff]
        %v247 = vld [vmem:[%s205 + $0xe0] sm:$0xff]
        %v248 = vld [vmem:[%s205 + $0xe8] sm:$0xff]
        %v249 = vld [vmem:[%s205 + $0xf0] sm:$0xff]
        %v250 = vld [vmem:[%s205 + $0xf8] sm:$0xff]
        %v251 = vld [vmem:[%s215] sm:$0xf]
        %v252 = vld [vmem:[%s215 + $0x4] sm:$0xf]
        %v253 = vld [vmem:[%s215 + $0x8] sm:$0xf]
        %v254 = vld [vmem:[%s215 + $0xc] sm:$0xf]
        %v255 = vld [vmem:[%s215 + $0x10] sm:$0xf]
        %v256 = vld [vmem:[%s215 + $0x14] sm:$0xf]
        %v257 = vld [vmem:[%s215 + $0x18] sm:$0xf]
        %v258 = vld [vmem:[%s215 + $0x1c] sm:$0xf]
        %v259 = vld [vmem:[%s215 + $0x20] sm:$0xf]
        %v260 = vld [vmem:[%s215 + $0x24] sm:$0xf]
        %v261 = vld [vmem:[%s215 + $0x28] sm:$0xf]
        %v262 = vld [vmem:[%s215 + $0x2c] sm:$0xf]
        %v263 = vld [vmem:[%s215 + $0x30] sm:$0xf]
        %v264 = vld [vmem:[%s215 + $0x34] sm:$0xf]
        %v265 = vld [vmem:[%s215 + $0x38] sm:$0xf]
        %v266 = vld [vmem:[%s215 + $0x3c] sm:$0xf]
        %v267 = vld [vmem:[%s215 + $0x40] sm:$0xf]
        %v268 = vld [vmem:[%s215 + $0x44] sm:$0xf]
        %v269 = vld [vmem:[%s215 + $0x48] sm:$0xf]
        %v270 = vld [vmem:[%s215 + $0x4c] sm:$0xf]
        %v303 = vunpack.c.l.b16 %v219
        %v304 = vunpack.c.h.b16 %v219
        %v305 = vunpack.c.l.b16 %v220
        %v306 = vunpack.c.h.b16 %v220
        %v307 = vunpack.c.l.b16 %v221
        %v308 = vunpack.c.h.b16 %v221
        %v309 = vunpack.c.l.b16 %v222
        %v310 = vunpack.c.h.b16 %v222
        %v311 = vunpack.c.l.b16 %v223
        %v312 = vunpack.c.h.b16 %v223
        %v313 = vunpack.c.l.b16 %v224
        %v314 = vunpack.c.h.b16 %v224
        %v315 = vunpack.c.l.b16 %v225
        %v316 = vunpack.c.h.b16 %v225
        %v317 = vunpack.c.l.b16 %v226
        %v318 = vunpack.c.h.b16 %v226
        %v319 = vunpack.c.l.b16 %v227
        %v320 = vunpack.c.h.b16 %v227
        %v321 = vunpack.c.l.b16 %v228
        %v322 = vunpack.c.h.b16 %v228
        %v323 = vunpack.c.l.b16 %v229
        %v324 = vunpack.c.h.b16 %v229
        %v325 = vunpack.c.l.b16 %v230
        %v326 = vunpack.c.h.b16 %v230
        %v327 = vunpack.c.l.b16 %v231
        %v328 = vunpack.c.h.b16 %v231
        %v329 = vunpack.c.l.b16 %v232
        %v330 = vunpack.c.h.b16 %v232
        %v331 = vunpack.c.l.b16 %v233
        %v332 = vunpack.c.h.b16 %v233
        %v333 = vunpack.c.l.b16 %v234
        %v334 = vunpack.c.h.b16 %v234
        %v335 = vunpack.c.l.b16 %v235
        %v336 = vunpack.c.h.b16 %v235
        %v337 = vunpack.c.l.b16 %v236
        %v338 = vunpack.c.h.b16 %v236
        %v339 = vunpack.c.l.b16 %v237
        %v340 = vunpack.c.h.b16 %v237
        %v341 = vunpack.c.l.b16 %v238
        %v342 = vunpack.c.h.b16 %v238
        %v343 = vunpack.c.l.b16 %v239
        %v344 = vunpack.c.h.b16 %v239
        %v345 = vunpack.c.l.b16 %v240
        %v346 = vunpack.c.h.b16 %v240
        %v347 = vunpack.c.l.b16 %v241
        %v348 = vunpack.c.h.b16 %v241
        %v349 = vunpack.c.l.b16 %v242
        %v350 = vunpack.c.h.b16 %v242
        %v351 = vunpack.c.l.b16 %v243
        %v352 = vunpack.c.h.b16 %v243
        %v353 = vunpack.c.l.b16 %v244
        %v354 = vunpack.c.h.b16 %v244
        %v355 = vunpack.c.l.b16 %v245
        %v356 = vunpack.c.h.b16 %v245
        %v357 = vunpack.c.l.b16 %v246
        %v358 = vunpack.c.h.b16 %v246
        %v359 = vunpack.c.l.b16 %v247
        %v360 = vunpack.c.h.b16 %v247
        %v361 = vunpack.c.l.b16 %v248
        %v362 = vunpack.c.h.b16 %v248
        %v363 = vunpack.c.l.b16 %v249
        %v364 = vunpack.c.h.b16 %v249
        %v365 = vunpack.c.l.b16 %v250
        %v366 = vunpack.c.h.b16 %v250
        %v367 = vpack.c.b16 %v305, %v303
        %v368 = vpack.c.b16 %v306, %v304
        %v369 = vpack.c.b16 %v309, %v307
        %v370 = vpack.c.b16 %v310, %v308
        %v371 = vpack.c.b16 %v313, %v311
        %v372 = vpack.c.b16 %v314, %v312
        %v373 = vpack.c.b16 %v317, %v315
        %v374 = vpack.c.b16 %v318, %v316
        %v375 = vpack.c.b16 %v321, %v319
        %v376 = vpack.c.b16 %v322, %v320
        %v377 = vpack.c.b16 %v325, %v323
        %v378 = vpack.c.b16 %v326, %v324
        %v379 = vpack.c.b16 %v329, %v327
        %v380 = vpack.c.b16 %v330, %v328
        %v381 = vpack.c.b16 %v333, %v331
        %v382 = vpack.c.b16 %v334, %v332
        %v383 = vpack.c.b16 %v337, %v335
        %v384 = vpack.c.b16 %v338, %v336
        %v385 = vpack.c.b16 %v341, %v339
        %v386 = vpack.c.b16 %v342, %v340
        %v387 = vpack.c.b16 %v345, %v343
        %v388 = vpack.c.b16 %v346, %v344
        %v389 = vpack.c.b16 %v349, %v347
        %v390 = vpack.c.b16 %v350, %v348
        %v391 = vpack.c.b16 %v353, %v351
        %v392 = vpack.c.b16 %v354, %v352
        %v393 = vpack.c.b16 %v357, %v355
        %v394 = vpack.c.b16 %v358, %v356
        %v395 = vpack.c.b16 %v361, %v359
        %v396 = vpack.c.b16 %v362, %v360
        %v397 = vpack.c.b16 %v365, %v363
        %v398 = vpack.c.b16 %v366, %v364
        %v435 = vunpack.c.l.b16 %v251
        %v436 = vunpack.c.l.b16 %v252
        %v437 = vunpack.c.l.b16 %v253
        %v438 = vunpack.c.l.b16 %v254
        %v439 = vunpack.c.l.b16 %v255
        %v440 = vunpack.c.l.b16 %v256
        %v441 = vunpack.c.l.b16 %v257
        %v442 = vunpack.c.l.b16 %v258
        %v443 = vunpack.c.l.b16 %v259
        %v444 = vunpack.c.l.b16 %v260
        %v445 = vunpack.c.l.b16 %v261
        %v446 = vunpack.c.l.b16 %v262
        %v447 = vunpack.c.l.b16 %v263
        %v448 = vunpack.c.l.b16 %v264
        %v449 = vunpack.c.l.b16 %v265
        %v450 = vunpack.c.l.b16 %v266
        %v451 = vunpack.c.l.b16 %v267
        %v452 = vunpack.c.l.b16 %v268
        %v453 = vunpack.c.l.b16 %v269
        %v454 = vunpack.c.l.b16 %v270
        %v455 = vpack.c.b16 %v436, %v435
        %v456 = vpack.c.b16 %v438, %v437
        %v457 = vpack.c.b16 %v440, %v439
        %v458 = vpack.c.b16 %v442, %v441
        %v459 = vpack.c.b16 %v444, %v443
        %v460 = vpack.c.b16 %v446, %v445
        %v461 = vpack.c.b16 %v448, %v447
        %v462 = vpack.c.b16 %v450, %v449
        %v463 = vpack.c.b16 %v452, %v451
        %v464 = vpack.c.b16 %v454, %v453
        %vm475 = vcmask 261120
        %v477 = vsel %vm475, %v368, 0
        %v480 = vsel %vm475, %v370, 0
        %v483 = vsel %vm475, %v372, 0
        %v486 = vsel %vm475, %v374, 0
        %v489 = vsel %vm475, %v376, 0
        %v492 = vsel %vm475, %v378, 0
        %v495 = vsel %vm475, %v380, 0
        %v498 = vsel %vm475, %v382, 0
        %v501 = vsel %vm475, %v384, 0
        %v504 = vsel %vm475, %v386, 0
        %v507 = vsel %vm475, %v388, 0
        %v510 = vsel %vm475, %v390, 0
        %v513 = vsel %vm475, %v392, 0
        %v516 = vsel %vm475, %v394, 0
        %v519 = vsel %vm475, %v396, 0
        %v522 = vsel %vm475, %v398, 0
        %524 = vmatpush.bf16.msra.mxu0 %v462
        %525 = vmatpush.bf16.msra.mxu0 %v461
        %526 = vmatpush.bf16.msra.mxu0 %v460
        %527 = vmatpush.bf16.msra.mxu0 %v459
        %528 = vmatpush.bf16.msra.mxu0 %v458
        %529 = vmatpush.bf16.msra.mxu0 %v457
        %530 = vmatpush.bf16.msra.mxu0 %v456
        %531 = vmatpush.bf16.msra.mxu0 %v455
        %532 = vmatmul.bf16.gmra.mxu0 %v367
        %v533 = vpop.f32.mrf.mxu0
        %v534 = vadd.f32 0.0, %v533
        %v535 = vpop.f32.mrf.mxu0
        %v536 = vadd.f32 0.0, %v535
        %537 = vmatmul.bf16.gmra.mxu0 %v369
        %v538 = vpop.f32.mrf.mxu0
        %v539 = vadd.f32 0.0, %v538
        %v540 = vpop.f32.mrf.mxu0
        %v541 = vadd.f32 0.0, %v540
        %542 = vmatmul.bf16.gmra.mxu0 %v371
        %v543 = vpop.f32.mrf.mxu0
        %v544 = vadd.f32 0.0, %v543
        %v545 = vpop.f32.mrf.mxu0
        %v546 = vadd.f32 0.0, %v545
        %547 = vmatmul.bf16.gmra.mxu0 %v373
        %v548 = vpop.f32.mrf.mxu0
        %v549 = vadd.f32 0.0, %v548
        %v550 = vpop.f32.mrf.mxu0
        %v551 = vadd.f32 0.0, %v550
        %552 = vmatmul.bf16.gmra.mxu0 %v375
        %v553 = vpop.f32.mrf.mxu0
        %v554 = vadd.f32 0.0, %v553
        %v555 = vpop.f32.mrf.mxu0
        %v556 = vadd.f32 0.0, %v555
        %557 = vmatmul.bf16.gmra.mxu0 %v377
        %v558 = vpop.f32.mrf.mxu0
        %v559 = vadd.f32 0.0, %v558
        %v560 = vpop.f32.mrf.mxu0
        %v561 = vadd.f32 0.0, %v560
        %562 = vmatmul.bf16.gmra.mxu0 %v379
        %v563 = vpop.f32.mrf.mxu0
        %v564 = vadd.f32 0.0, %v563
        %v565 = vpop.f32.mrf.mxu0
        %v566 = vadd.f32 0.0, %v565
        %567 = vmatmul.bf16.gmra.mxu0 %v381
        %v568 = vpop.f32.mrf.mxu0
        %v569 = vadd.f32 0.0, %v568
        %v570 = vpop.f32.mrf.mxu0
        %v571 = vadd.f32 0.0, %v570
        %572 = vmatmul.bf16.gmra.mxu0 %v383
        %v573 = vpop.f32.mrf.mxu0
        %v574 = vadd.f32 0.0, %v573
        %v575 = vpop.f32.mrf.mxu0
        %v576 = vadd.f32 0.0, %v575
        %577 = vmatmul.bf16.gmra.mxu0 %v385
        %v578 = vpop.f32.mrf.mxu0
        %v579 = vadd.f32 0.0, %v578
        %v580 = vpop.f32.mrf.mxu0
        %v581 = vadd.f32 0.0, %v580
        %582 = vmatmul.bf16.gmra.mxu0 %v387
        %v583 = vpop.f32.mrf.mxu0
        %v584 = vadd.f32 0.0, %v583
        %v585 = vpop.f32.mrf.mxu0
        %v586 = vadd.f32 0.0, %v585
        %587 = vmatmul.bf16.gmra.mxu0 %v389
        %v588 = vpop.f32.mrf.mxu0
        %v589 = vadd.f32 0.0, %v588
        %v590 = vpop.f32.mrf.mxu0
        %v591 = vadd.f32 0.0, %v590
        %592 = vmatmul.bf16.gmra.mxu0 %v391
        %v593 = vpop.f32.mrf.mxu0
        %v594 = vadd.f32 0.0, %v593
        %v595 = vpop.f32.mrf.mxu0
        %v596 = vadd.f32 0.0, %v595
        %597 = vmatmul.bf16.gmra.mxu0 %v393
        %v598 = vpop.f32.mrf.mxu0
        %v599 = vadd.f32 0.0, %v598
        %v600 = vpop.f32.mrf.mxu0
        %v601 = vadd.f32 0.0, %v600
        %602 = vmatmul.bf16.gmra.mxu0 %v395
        %v603 = vpop.f32.mrf.mxu0
        %v604 = vadd.f32 0.0, %v603
        %v605 = vpop.f32.mrf.mxu0
        %v606 = vadd.f32 0.0, %v605
        %607 = vmatmul.bf16.gmra.mxu0 %v397
        %v608 = vpop.f32.mrf.mxu0
        %v609 = vadd.f32 0.0, %v608
        %v610 = vpop.f32.mrf.mxu0
        %v611 = vadd.f32 0.0, %v610
        %612 = vdwg.mxu0
        %613 = vmatpush.bf16.msra.mxu0 0
        %614 = vmatpush.bf16.msra.mxu0 0
        %615 = vmatpush.bf16.msra.mxu0 0
        %616 = vmatpush.bf16.msra.mxu0 0
        %617 = vmatpush.bf16.msra.mxu0 0
        %618 = vmatpush.bf16.msra.mxu0 0
        %619 = vmatpush.bf16.msra.mxu0 %v464
        %620 = vmatpush.bf16.msra.mxu0 %v463
        %621 = vmatmul.bf16.gmra.mxu0 %v477
        %v622 = vpop.f32.mrf.mxu0
        %v623 = vadd.f32 %v534, %v622
        %v624 = vpop.f32.mrf.mxu0
        %v625 = vadd.f32 %v536, %v624
        %626 = vmatmul.bf16.gmra.mxu0 %v480
        %v627 = vpop.f32.mrf.mxu0
        %v628 = vadd.f32 %v539, %v627
        %v629 = vpop.f32.mrf.mxu0
        %v630 = vadd.f32 %v541, %v629
        %631 = vmatmul.bf16.gmra.mxu0 %v483
        %v632 = vpop.f32.mrf.mxu0
        %v633 = vadd.f32 %v544, %v632
        %v634 = vpop.f32.mrf.mxu0
        %v635 = vadd.f32 %v546, %v634
        %636 = vmatmul.bf16.gmra.mxu0 %v486
        %v637 = vpop.f32.mrf.mxu0
        %v638 = vadd.f32 %v549, %v637
        %v639 = vpop.f32.mrf.mxu0
        %v640 = vadd.f32 %v551, %v639
        %641 = vmatmul.bf16.gmra.mxu0 %v489
        %v642 = vpop.f32.mrf.mxu0
        %v643 = vadd.f32 %v554, %v642
        %v644 = vpop.f32.mrf.mxu0
        %v645 = vadd.f32 %v556, %v644
        %646 = vmatmul.bf16.gmra.mxu0 %v492
        %v647 = vpop.f32.mrf.mxu0
        %v648 = vadd.f32 %v559, %v647
        %v649 = vpop.f32.mrf.mxu0
        %v650 = vadd.f32 %v561, %v649
        %651 = vmatmul.bf16.gmra.mxu0 %v495
        %v652 = vpop.f32.mrf.mxu0
        %v653 = vadd.f32 %v564, %v652
        %v654 = vpop.f32.mrf.mxu0
        %v655 = vadd.f32 %v566, %v654
        %656 = vmatmul.bf16.gmra.mxu0 %v498
        %v657 = vpop.f32.mrf.mxu0
        %v658 = vadd.f32 %v569, %v657
        %v659 = vpop.f32.mrf.mxu0
        %v660 = vadd.f32 %v571, %v659
        %661 = vmatmul.bf16.gmra.mxu0 %v501
        %v662 = vpop.f32.mrf.mxu0
        %v663 = vadd.f32 %v574, %v662
        %v664 = vpop.f32.mrf.mxu0
        %v665 = vadd.f32 %v576, %v664
        %666 = vmatmul.bf16.gmra.mxu0 %v504
        %v667 = vpop.f32.mrf.mxu0
        %v668 = vadd.f32 %v579, %v667
        %v669 = vpop.f32.mrf.mxu0
        %v670 = vadd.f32 %v581, %v669
        %671 = vmatmul.bf16.gmra.mxu0 %v507
        %v672 = vpop.f32.mrf.mxu0
        %v673 = vadd.f32 %v584, %v672
        %v674 = vpop.f32.mrf.mxu0
        %v675 = vadd.f32 %v586, %v674
        %676 = vmatmul.bf16.gmra.mxu0 %v510
        %v677 = vpop.f32.mrf.mxu0
        %v678 = vadd.f32 %v589, %v677
        %v679 = vpop.f32.mrf.mxu0
        %v680 = vadd.f32 %v591, %v679
        %681 = vmatmul.bf16.gmra.mxu0 %v513
        %v682 = vpop.f32.mrf.mxu0
        %v683 = vadd.f32 %v594, %v682
        %v684 = vpop.f32.mrf.mxu0
        %v685 = vadd.f32 %v596, %v684
        %686 = vmatmul.bf16.gmra.mxu0 %v516
        %v687 = vpop.f32.mrf.mxu0
        %v688 = vadd.f32 %v599, %v687
        %v689 = vpop.f32.mrf.mxu0
        %v690 = vadd.f32 %v601, %v689
        %691 = vmatmul.bf16.gmra.mxu0 %v519
        %v692 = vpop.f32.mrf.mxu0
        %v693 = vadd.f32 %v604, %v692
        %v694 = vpop.f32.mrf.mxu0
        %v695 = vadd.f32 %v606, %v694
        %696 = vmatmul.bf16.gmra.mxu0 %v522
        %v697 = vpop.f32.mrf.mxu0
        %v698 = vadd.f32 %v609, %v697
        %v699 = vpop.f32.mrf.mxu0
        %v700 = vadd.f32 %v611, %v699
        %701 = vdwg.mxu0
        %v702 = vpack.c.bf16 %v623, %v623
        %v703 = vpack.c.bf16 %v625, %v625
        %v704 = vpack.c.bf16 %v628, %v628
        %v705 = vpack.c.bf16 %v630, %v630
        %v706 = vpack.c.bf16 %v633, %v633
        %v707 = vpack.c.bf16 %v635, %v635
        %v708 = vpack.c.bf16 %v638, %v638
        %v709 = vpack.c.bf16 %v640, %v640
        %v710 = vpack.c.bf16 %v643, %v643
        %v711 = vpack.c.bf16 %v645, %v645
        %v712 = vpack.c.bf16 %v648, %v648
        %v713 = vpack.c.bf16 %v650, %v650
        %v714 = vpack.c.bf16 %v653, %v653
        %v715 = vpack.c.bf16 %v655, %v655
        %v716 = vpack.c.bf16 %v658, %v658
        %v717 = vpack.c.bf16 %v660, %v660
        %v718 = vpack.c.bf16 %v663, %v663
        %v719 = vpack.c.bf16 %v665, %v665
        %v720 = vpack.c.bf16 %v668, %v668
        %v721 = vpack.c.bf16 %v670, %v670
        %v722 = vpack.c.bf16 %v673, %v673
        %v723 = vpack.c.bf16 %v675, %v675
        %v724 = vpack.c.bf16 %v678, %v678
        %v725 = vpack.c.bf16 %v680, %v680
        %v726 = vpack.c.bf16 %v683, %v683
        %v727 = vpack.c.bf16 %v685, %v685
        %v728 = vpack.c.bf16 %v688, %v688
        %v729 = vpack.c.bf16 %v690, %v690
        %v730 = vpack.c.bf16 %v693, %v693
        %v731 = vpack.c.bf16 %v695, %v695
        %v732 = vpack.c.bf16 %v698, %v698
        %v733 = vpack.c.bf16 %v700, %v700
        %vm734 = vcmask 519168
        %735 = vst.msk [vmem:[%s195] sm:$0xf] %vm734, %v702
        %736 = vst.msk [vmem:[%s195 + $0x4] sm:$0xf] %vm734, %v703
        %737 = vst.msk [vmem:[%s195 + $0x8] sm:$0xf] %vm734, %v704
        %738 = vst.msk [vmem:[%s195 + $0xc] sm:$0xf] %vm734, %v705
        %739 = vst.msk [vmem:[%s195 + $0x10] sm:$0xf] %vm734, %v706
        %740 = vst.msk [vmem:[%s195 + $0x14] sm:$0xf] %vm734, %v707
        %741 = vst.msk [vmem:[%s195 + $0x18] sm:$0xf] %vm734, %v708
        %742 = vst.msk [vmem:[%s195 + $0x1c] sm:$0xf] %vm734, %v709
        %743 = vst.msk [vmem:[%s195 + $0x20] sm:$0xf] %vm734, %v710
        %744 = vst.msk [vmem:[%s195 + $0x24] sm:$0xf] %vm734, %v711
        %745 = vst.msk [vmem:[%s195 + $0x28] sm:$0xf] %vm734, %v712
        %746 = vst.msk [vmem:[%s195 + $0x2c] sm:$0xf] %vm734, %v713
        %747 = vst.msk [vmem:[%s195 + $0x30] sm:$0xf] %vm734, %v714
        %748 = vst.msk [vmem:[%s195 + $0x34] sm:$0xf] %vm734, %v715
        %749 = vst.msk [vmem:[%s195 + $0x38] sm:$0xf] %vm734, %v716
        %750 = vst.msk [vmem:[%s195 + $0x3c] sm:$0xf] %vm734, %v717
        %751 = vst.msk [vmem:[%s195 + $0x40] sm:$0xf] %vm734, %v718
        %752 = vst.msk [vmem:[%s195 + $0x44] sm:$0xf] %vm734, %v719
        %753 = vst.msk [vmem:[%s195 + $0x48] sm:$0xf] %vm734, %v720
        %754 = vst.msk [vmem:[%s195 + $0x4c] sm:$0xf] %vm734, %v721
        %755 = vst.msk [vmem:[%s195 + $0x50] sm:$0xf] %vm734, %v722
        %756 = vst.msk [vmem:[%s195 + $0x54] sm:$0xf] %vm734, %v723
        %757 = vst.msk [vmem:[%s195 + $0x58] sm:$0xf] %vm734, %v724
        %758 = vst.msk [vmem:[%s195 + $0x5c] sm:$0xf] %vm734, %v725
        %759 = vst.msk [vmem:[%s195 + $0x60] sm:$0xf] %vm734, %v726
        %760 = vst.msk [vmem:[%s195 + $0x64] sm:$0xf] %vm734, %v727
        %761 = vst.msk [vmem:[%s195 + $0x68] sm:$0xf] %vm734, %v728
        %762 = vst.msk [vmem:[%s195 + $0x6c] sm:$0xf] %vm734, %v729
        %763 = vst.msk [vmem:[%s195 + $0x70] sm:$0xf] %vm734, %v730
        %764 = vst.msk [vmem:[%s195 + $0x74] sm:$0xf] %vm734, %v731
        %765 = vst.msk [vmem:[%s195 + $0x78] sm:$0xf] %vm734, %v732
        %766 = vst.msk [vmem:[%s195 + $0x7c] sm:$0xf] %vm734, %v733
        %s767 = sand.u32 %s101, 1
        %s768 = scalar_lea.sflag [#allocation3], %s767
        %s769 = sand.u32 %s101, 1
        %s770 = smul.addr %s769, 128
        %s771 = scalar_lea.vmem [#allocation2], %s770
        // Predicated region
        $region29: #{conv_stem_7x7.1} parent=27 // pred_check
          %p772 = pneg %p111
        $region30: #{conv_stem_7x7.1} parent=27 // pred_check_branch
          %774 = sbr.rel (%p772) target = $region32
        $region31: #{conv_stem_7x7.1} parent=27 // pred_region
          %s775 = smul.u32 32, %s21
          %777 = vsyncadd %s768, 0
          %s778 = sadd.s32 %s22, %s775
          %s779 = smul.addr %s778, 4
          %s780 = scalar_lea.hbm %s2, %s779
          %s781 = sshll.u32 %s771, 4
          %s782 = int_to_ptr.vmem [resolvable:$true] %s781
          %s783 = sshll.u32 %s780, 4
          %s784 = int_to_ptr.hbm [resolvable:$true] %s783
          %789 = dma.vmem_to_hbm [thread:$0]  %s782, 2048, %s784, %s768, 64, 64, 4
        $region32: #{conv_stem_7x7.1} parent=27 // pred_fallthru
          _
      $region28: #{conv_stem_7x7.1} parent=5 // pred_fallthru
        _
      %p790 = scmp.le.s32.totalorder 2, %s11
      // Predicated region
      $region33: #{conv_stem_7x7.1} parent=5 // pred_check
        %p791 = pneg %p790
      $region34: #{conv_stem_7x7.1} parent=5 // pred_check_branch
        %793 = sbr.rel (%p791) target = $region36
      $region35: #{conv_stem_7x7.1} parent=5 // pred_region
        %s794 = ssub.s32 %s11, 2
        // Predicated region
        $region37: #{conv_stem_7x7.1} parent=35 // pred_check
          %p795 = pneg %p117
        $region38: #{conv_stem_7x7.1} parent=35 // pred_check_branch
          %797 = sbr.rel (%p795) target = $region40
        $region39: #{conv_stem_7x7.1} parent=35 // pred_region
          %s798 = sand.u32 %s102, 1
          %s799 = scalar_lea.sflag [#allocation3], %s798
          %s800 = sand.u32 %s102, 1
          %s801 = smul.addr %s800, 128
          %s802 = scalar_lea.vmem [#allocation2], %s801
          %804 = dma.done %s799, 2048
        $region40: #{conv_stem_7x7.1} parent=35 // pred_fallthru
          _
      $region36: #{conv_stem_7x7.1} parent=5 // pred_fallthru
        _
    $region6: #{conv_stem_7x7.1} parent=1 // loop_footer
      %s15 = sadd.s32 1, %s11
    $region7: #{conv_stem_7x7.1} parent=1 // loop_footer_branch
      %10 = sbr.rel target = $region3
    $region8: #{conv_stem_7x7.1} parent=1 // loop_exit
      _
    %805 = vsyncpa [#allocation3], 1
    %s806 = scalar_lea.sflag [#allocation3], 1
    %807 = vsyncpa %s806, 1

</llo_original>
